<compile_context>
chip_gen: v7x
topology: tpu7x:2x2x1
jax: 0.10.0
libtpu: 0.0.40
codegen_flags: <defaults>
</compile_context>

<pallas_src>
import functools

import jax
import jax.numpy as jnp
from jax.experimental import pallas as pl
from jax.experimental.pallas import tpu as pltpu


def _round_up(x, m):
    return (x + m - 1) // m * m


def _pick_row_tile(rows, tm):
    """Row tile: multiple of 16 (bf16 sublane packing); >=2 grid steps when possible."""
    tm = max(16, _round_up(tm, 16))
    if rows < 32:
        return _round_up(max(rows, 1), 16)
    # At least 2 grid steps so ("parallel",) spreads rows across both v7x TCs.
    return min(tm, _round_up(pl.cdiv(rows, 2), 16))


def _erf_approx(z):
    """erf via Abramowitz & Stegun 7.1.26 (|error| < 1.5e-7): exp (EUP) + VPU ops."""
    sign = jnp.where(z < 0.0, -1.0, 1.0)
    a = jnp.abs(z)
    # Exact reciprocal (approx=True would ride the EUP slot at ~1e-4 precision;
    # kept exact so parity with the PyTorch erf GELU stays ~1e-7).
    t = pl.reciprocal(1.0 + 0.3275911 * a)
    poly = t * (0.254829592 + t * (-0.284496736 + t * (1.421413741
            + t * (-1.453152027 + t * 1.061405429))))
    return sign * (1.0 - poly * jnp.exp(-a * a))


def _gelu_erf(x):
    # HF / torch.nn.functional.gelu default: x * 0.5 * (1 + erf(x / sqrt(2)))
    return 0.5 * x * (1.0 + _erf_approx(x * 0.7071067811865476))


def _gelu_tanh(x):
    # Fast path for VALU-bound chips: EUP tanh + ~8 VPU ops (~1e-3 parity).
    return 0.5 * x * (1.0 + jnp.tanh(0.7978845608028654 * (x + 0.044715 * x * x * x)))


def _transform_kernel(*refs, eps, hidden_real, use_mask, act):
    if use_mask:
        x_ref, w_ref, b_ref, gamma_ref, beta_ref, mask_ref, o_ref = refs
    else:
        x_ref, w_ref, b_ref, gamma_ref, beta_ref, o_ref = refs
        mask_ref = None

    # ---- dense: cast the streamed row tile to bf16 in-kernel (hidden under
    #      the matmul), bf16 x bf16 -> f32 accumulation on the MXU ----
    xb = x_ref[...].astype(jnp.bfloat16)
    h = jnp.dot(xb, w_ref[...], preferred_element_type=jnp.float32)
    h = h + b_ref[...]

    # ---- activation (padded hidden columns stay exactly 0 through GELU) ----
    if act == "tanh":
        h = _gelu_tanh(h)
    else:
        h = _gelu_erf(h)

    # ---- LayerNorm in f32 over the real hidden columns ----
    inv_h = 1.0 / hidden_real
    mu = jnp.sum(h, axis=-1, keepdims=True) * inv_h
    centered = h - mu
    if use_mask:
        centered = centered * mask_ref[...]          # zero the padded columns
    var = jnp.sum(centered * centered, axis=-1, keepdims=True) * inv_h
    inv = jax.lax.rsqrt(var + eps)                   # EUP
    y = centered * (inv * gamma_ref[...]) + beta_ref[...]

    o_ref[...] = y.astype(o_ref.dtype)


def bert_prediction_head_transform(x, w, b, gamma, beta, *, eps=1e-12, tm=512,
                                   out_dtype=None, act="erf"):
    """x: (B, S, H). w: (H, H) in (in_features, out_features) layout. b/gamma/beta: (H,).

    out_dtype: None -> x.dtype; pass jnp.bfloat16 when the downstream decoder
    consumes bf16 to cut output HBM traffic by ~2x.
    act: "erf" (exact-parity HF 'gelu') or "tanh" (fast path, ~1e-3 parity).
    """
    B, S, H = x.shape
    rows = B * S
    out_dtype = x.dtype if out_dtype is None else out_dtype

    Hp = _round_up(H, 128)                 # lane-dense output (no masked vst)
    tm_eff = _pick_row_tile(rows, tm)
    rows_p = _round_up(rows, tm_eff)
    use_mask = Hp != H

    # x stays in its native dtype (bf16 cast happens in-kernel); pad only if needed.
    x2 = x.reshape(rows, H)
    if Hp != H or rows_p != rows:
        x2 = jnp.pad(x2, ((0, rows_p - rows), (0, Hp - H)))

    # Small resident params: weight in bf16 (MXU native), affine params in f32.
    w_bf = w.astype(jnp.bfloat16)
    b_f = b.astype(jnp.float32)
    g_f = gamma.astype(jnp.float32)
    be_f = beta.astype(jnp.float32)
    if Hp != H:
        w_bf = jnp.pad(w_bf, ((0, Hp - H), (0, Hp - H)))
        b_f = jnp.pad(b_f, (0, Hp - H))
        g_f = jnp.pad(g_f, (0, Hp - H))
        be_f = jnp.pad(be_f, (0, Hp - H))

    inputs = [x2, w_bf, b_f.reshape(1, Hp), g_f.reshape(1, Hp), be_f.reshape(1, Hp)]

    # Resident operands have a constant index_map -> single-buffer them.
    def resident(shape):
        return pl.BlockSpec(shape, lambda i: (0, 0), pipeline_mode=pl.Buffered(1))

    in_specs = [
        pl.BlockSpec((tm_eff, Hp), lambda i: (i, 0)),   # streamed x row tile
        resident((Hp, Hp)),                             # dense weight
        resident((1, Hp)),                              # dense bias
        resident((1, Hp)),                              # LN gamma
        resident((1, Hp)),                              # LN beta
    ]
    if use_mask:
        mask = (jnp.arange(Hp) < H).astype(jnp.float32).reshape(1, Hp)
        inputs.append(mask)
        in_specs.append(resident((1, Hp)))              # pad-column mask

    kernel = functools.partial(_transform_kernel, eps=eps, hidden_real=H,
                               use_mask=use_mask, act=act)

    out = pl.pallas_call(
        kernel,
        out_shape=jax.ShapeDtypeStruct((rows_p, Hp), out_dtype),
        grid_spec=pltpu.PrefetchScalarGridSpec(
            num_scalar_prefetch=0,
            grid=(rows_p // tm_eff,),
            in_specs=in_specs,
            out_specs=pl.BlockSpec((tm_eff, Hp), lambda i: (i, 0)),
        ),
        compiler_params=pltpu.CompilerParams(
            dimension_semantics=("parallel",)),          # row tiles shard across TCs
    )(*inputs)

    return out[:rows, :H].reshape(B, S, H)


def _reference(x, w, b, gamma, beta, eps=1e-12):
    # Same numerics as the kernel default path: bf16 matmul operands, f32
    # accumulation, erf-based GELU, f32 LayerNorm.
    h = jnp.einsum("bsh,hk->bsk",
                   x.astype(jnp.bfloat16), w.astype(jnp.bfloat16),
                   preferred_element_type=jnp.float32) + b
    h = jax.nn.gelu(h, approximate=False)
    mu = jnp.mean(h, axis=-1, keepdims=True)
    var = jnp.mean((h - mu) ** 2, axis=-1, keepdims=True)
    return (h - mu) * jax.lax.rsqrt(var + eps) * gamma + beta


if __name__ == "__main__":
    key = jax.random.PRNGKey(0)
    B, S, H = 2, 8, 32  # small shapes: batch=2, seq=8, hidden=32
    k_x, k_w, k_b, k_g, k_beta = jax.random.split(key, 5)

    x = jax.random.normal(k_x, (B, S, H), dtype=jnp.float32)
    # nn.Linear(H, H): torch stores weight as (out, in); here we keep the
    # transposed (in, out) layout so the kernel computes x @ W directly.
    w = jax.random.normal(k_w, (H, H), dtype=jnp.float32) * 0.02
    b = jax.random.normal(k_b, (H,), dtype=jnp.float32) * 0.02
    gamma = 1.0 + 0.1 * jax.random.normal(k_g, (H,), dtype=jnp.float32)
    beta = 0.1 * jax.random.normal(k_beta, (H,), dtype=jnp.float32)

    ref = _reference(x, w, b, gamma, beta)

    # Default path: erf GELU, output in the input dtype (f32 here).
    out = bert_prediction_head_transform(x, w, b, gamma, beta)
    out = jax.block_until_ready(out)
    assert out.shape == (B, S, H)
    assert jnp.allclose(out, ref, atol=1e-3, rtol=1e-3), "mismatch vs reference"

    # Fast path: tanh GELU + bf16 output (for VALU/HBM-bound deployments);
    # loose tolerance covers bf16 quantization + tanh-GELU approximation.
    out_fast = bert_prediction_head_transform(x, w, b, gamma, beta,
                                              out_dtype=jnp.bfloat16, act="tanh")
    out_fast = jax.block_until_ready(out_fast)
    assert jnp.allclose(out_fast.astype(jnp.float32), ref, atol=5e-2, rtol=5e-2), \
        "mismatch vs reference (fast path)"

    print("KERNEL_OK")
</pallas_src>

<mosaic_0001>
module attributes {stable_mosaic.version = 11 : i64} {
  func.func @_transform_kernel(%arg0: i32, %arg1: memref<16x128xf32, #tpu.memory_space<vmem>>, %arg2: memref<128x128xbf16, #tpu.memory_space<vmem>>, %arg3: memref<1x128xf32, #tpu.memory_space<vmem>>, %arg4: memref<1x128xf32, #tpu.memory_space<vmem>>, %arg5: memref<1x128xf32, #tpu.memory_space<vmem>>, %arg6: memref<1x128xf32, #tpu.memory_space<vmem>>, %arg7: memref<16x128xf32, #tpu.memory_space<vmem>>) attributes {dimension_semantics = [#tpu.dimension_semantics<parallel>], iteration_bounds = array<i64: 1>, scalar_prefetch = 0 : i64, scratch_operands = 0 : i64, tpu.core_type = #tpu.core_type<tc>, window_params = [{transform_indices = @transform_0, window_bounds = array<i64: 16, 128>}, {pipeline_mode = #tpu.pipeline_mode<synchronous>, transform_indices = @transform_1, window_bounds = array<i64: 128, 128>}, {pipeline_mode = #tpu.pipeline_mode<synchronous>, transform_indices = @transform_2, window_bounds = array<i64: 1, 128>}, {pipeline_mode = #tpu.pipeline_mode<synchronous>, transform_indices = @transform_3, window_bounds = array<i64: 1, 128>}, {pipeline_mode = #tpu.pipeline_mode<synchronous>, transform_indices = @transform_4, window_bounds = array<i64: 1, 128>}, {pipeline_mode = #tpu.pipeline_mode<synchronous>, transform_indices = @transform_5, window_bounds = array<i64: 1, 128>}, {transform_indices = @transform_6, window_bounds = array<i64: 16, 128>}]} {
    %c0 = arith.constant 0 : index
    %c0_0 = arith.constant 0 : index
    %0 = vector.load %arg1[%c0, %c0_0] : memref<16x128xf32, #tpu.memory_space<vmem>>, vector<16x128xf32>
    %1 = arith.truncf %0 : vector<16x128xf32> to vector<16x128xbf16>
    %c0_1 = arith.constant 0 : index
    %c0_2 = arith.constant 0 : index
    %2 = vector.load %arg2[%c0_1, %c0_2] : memref<128x128xbf16, #tpu.memory_space<vmem>>, vector<128x128xbf16>
    %cst = arith.constant dense<0.000000e+00> : vector<16x128xf32>
    %3 = tpu.matmul %1, %2, %cst {dimension_numbers = #tpu.dot_dimension_numbers<[1], [0], [0], [1], [0, 0, 1, 1], [], []>} : vector<16x128xbf16>, vector<128x128xbf16>, vector<16x128xf32> -> vector<16x128xf32>
    %c0_3 = arith.constant 0 : index
    %c0_4 = arith.constant 0 : index
    %4 = vector.load %arg3[%c0_3, %c0_4] : memref<1x128xf32, #tpu.memory_space<vmem>>, vector<1x128xf32>
    %5 = vector.broadcast %4 : vector<1x128xf32> to vector<16x128xf32>
    %6 = arith.addf %3, %5 : vector<16x128xf32>
    %cst_5 = arith.constant 5.000000e-01 : f32
    %7 = vector.broadcast %cst_5 : f32 to vector<16x128xf32>
    %8 = arith.mulf %7, %6 : vector<16x128xf32>
    %cst_6 = arith.constant 0.707106769 : f32
    %9 = vector.broadcast %cst_6 : f32 to vector<16x128xf32>
    %10 = arith.mulf %6, %9 : vector<16x128xf32>
    %cst_7 = arith.constant 0.000000e+00 : f32
    %11 = vector.broadcast %cst_7 : f32 to vector<16x128xf32>
    %12 = arith.cmpf olt, %10, %11 : vector<16x128xf32>
    %cst_8 = arith.constant -1.000000e+00 : f32
    %cst_9 = arith.constant 1.000000e+00 : f32
    %13 = vector.broadcast %cst_8 : f32 to vector<16x128xf32>
    %14 = vector.broadcast %cst_9 : f32 to vector<16x128xf32>
    %15 = arith.select %12, %13, %14 : vector<16x128xi1>, vector<16x128xf32>
    %16 = math.absf %10 : vector<16x128xf32>
    %cst_10 = arith.constant 0.327591091 : f32
    %17 = vector.broadcast %cst_10 : f32 to vector<16x128xf32>
    %18 = arith.mulf %17, %16 : vector<16x128xf32>
    %cst_11 = arith.constant 1.000000e+00 : f32
    %19 = vector.broadcast %cst_11 : f32 to vector<16x128xf32>
    %20 = arith.addf %19, %18 : vector<16x128xf32>
    %21 = tpu.reciprocal %20 : vector<16x128xf32> -> vector<16x128xf32>
    %cst_12 = arith.constant 1.06140542 : f32
    %22 = vector.broadcast %cst_12 : f32 to vector<16x128xf32>
    %23 = arith.mulf %21, %22 : vector<16x128xf32>
    %cst_13 = arith.constant -1.45315206 : f32
    %24 = vector.broadcast %cst_13 : f32 to vector<16x128xf32>
    %25 = arith.addf %24, %23 : vector<16x128xf32>
    %26 = arith.mulf %21, %25 : vector<16x128xf32>
    %cst_14 = arith.constant 1.42141378 : f32
    %27 = vector.broadcast %cst_14 : f32 to vector<16x128xf32>
    %28 = arith.addf %27, %26 : vector<16x128xf32>
    %29 = arith.mulf %21, %28 : vector<16x128xf32>
    %cst_15 = arith.constant -0.284496725 : f32
    %30 = vector.broadcast %cst_15 : f32 to vector<16x128xf32>
    %31 = arith.addf %30, %29 : vector<16x128xf32>
    %32 = arith.mulf %21, %31 : vector<16x128xf32>
    %cst_16 = arith.constant 0.254829586 : f32
    %33 = vector.broadcast %cst_16 : f32 to vector<16x128xf32>
    %34 = arith.addf %33, %32 : vector<16x128xf32>
    %35 = arith.mulf %21, %34 : vector<16x128xf32>
    %cst_17 = arith.constant 0.000000e+00 : f32
    %36 = vector.broadcast %cst_17 : f32 to vector<16x128xf32>
    %37 = arith.subf %36, %16 : vector<16x128xf32>
    %38 = arith.mulf %37, %16 : vector<16x128xf32>
    %39 = math.exp %38 : vector<16x128xf32>
    %40 = arith.mulf %35, %39 : vector<16x128xf32>
    %cst_18 = arith.constant 1.000000e+00 : f32
    %41 = vector.broadcast %cst_18 : f32 to vector<16x128xf32>
    %42 = arith.subf %41, %40 : vector<16x128xf32>
    %43 = arith.mulf %15, %42 : vector<16x128xf32>
    %cst_19 = arith.constant 1.000000e+00 : f32
    %44 = vector.broadcast %cst_19 : f32 to vector<16x128xf32>
    %45 = arith.addf %44, %43 : vector<16x128xf32>
    %46 = arith.mulf %8, %45 : vector<16x128xf32>
    %cst_20 = arith.constant dense<0.000000e+00> : vector<16xf32>
    %47 = vector.multi_reduction <add>, %46, %cst_20 [1] : vector<16x128xf32> to vector<16xf32>
    %48 = vector.shape_cast %47 : vector<16xf32> to vector<16x1xf32>
    %cst_21 = arith.constant 3.125000e-02 : f32
    %49 = vector.broadcast %cst_21 : f32 to vector<16x1xf32>
    %50 = arith.mulf %48, %49 : vector<16x1xf32>
    %51 = vector.broadcast %50 : vector<16x1xf32> to vector<16x128xf32>
    %52 = arith.subf %46, %51 : vector<16x128xf32>
    %c0_22 = arith.constant 0 : index
    %c0_23 = arith.constant 0 : index
    %53 = vector.load %arg6[%c0_22, %c0_23] : memref<1x128xf32, #tpu.memory_space<vmem>>, vector<1x128xf32>
    %54 = vector.broadcast %53 : vector<1x128xf32> to vector<16x128xf32>
    %55 = arith.mulf %52, %54 : vector<16x128xf32>
    %56 = arith.mulf %55, %55 : vector<16x128xf32>
    %cst_24 = arith.constant dense<0.000000e+00> : vector<16xf32>
    %57 = vector.multi_reduction <add>, %56, %cst_24 [1] : vector<16x128xf32> to vector<16xf32>
    %58 = vector.shape_cast %57 : vector<16xf32> to vector<16x1xf32>
    %cst_25 = arith.constant 3.125000e-02 : f32
    %59 = vector.broadcast %cst_25 : f32 to vector<16x1xf32>
    %60 = arith.mulf %58, %59 : vector<16x1xf32>
    %cst_26 = arith.constant 9.99999996E-13 : f32
    %61 = vector.broadcast %cst_26 : f32 to vector<16x1xf32>
    %62 = arith.addf %60, %61 : vector<16x1xf32>
    %63 = math.rsqrt %62 : vector<16x1xf32>
    %c0_27 = arith.constant 0 : index
    %c0_28 = arith.constant 0 : index
    %64 = vector.load %arg4[%c0_27, %c0_28] : memref<1x128xf32, #tpu.memory_space<vmem>>, vector<1x128xf32>
    %65 = vector.broadcast %63 : vector<16x1xf32> to vector<16x128xf32>
    %66 = vector.broadcast %64 : vector<1x128xf32> to vector<16x128xf32>
    %67 = arith.mulf %65, %66 : vector<16x128xf32>
    %68 = arith.mulf %55, %67 : vector<16x128xf32>
    %c0_29 = arith.constant 0 : index
    %c0_30 = arith.constant 0 : index
    %69 = vector.load %arg5[%c0_29, %c0_30] : memref<1x128xf32, #tpu.memory_space<vmem>>, vector<1x128xf32>
    %70 = vector.broadcast %69 : vector<1x128xf32> to vector<16x128xf32>
    %71 = arith.addf %68, %70 : vector<16x128xf32>
    %c0_31 = arith.constant 0 : index
    %c0_32 = arith.constant 0 : index
    %72 = vector.load %arg7[%c0_31, %c0_32] : memref<16x128xf32, #tpu.memory_space<vmem>>, vector<16x128xf32>
    tpu.vector_store %arg7[%c0_31, %c0_32], %71 {strides = array<i32>} : memref<16x128xf32, #tpu.memory_space<vmem>>, vector<16x128xf32>,
    return
  }
  func.func @transform_0(%arg0: i32) -> (i32, i32) {
    %c0_i32 = arith.constant 0 : i32
    %c0_i32_0 = arith.constant 0 : i32
    return %arg0, %c0_i32 : i32, i32
  }
  func.func @transform_1(%arg0: i32) -> (i32, i32) {
    %c0_i32 = arith.constant 0 : i32
    %c0_i32_0 = arith.constant 0 : i32
    %c0_i32_1 = arith.constant 0 : i32
    return %c0_i32, %c0_i32_0 : i32, i32
  }
  func.func @transform_2(%arg0: i32) -> (i32, i32) {
    %c0_i32 = arith.constant 0 : i32
    %c0_i32_0 = arith.constant 0 : i32
    %c0_i32_1 = arith.constant 0 : i32
    return %c0_i32, %c0_i32_0 : i32, i32
  }
  func.func @transform_3(%arg0: i32) -> (i32, i32) {
    %c0_i32 = arith.constant 0 : i32
    %c0_i32_0 = arith.constant 0 : i32
    %c0_i32_1 = arith.constant 0 : i32
    return %c0_i32, %c0_i32_0 : i32, i32
  }
  func.func @transform_4(%arg0: i32) -> (i32, i32) {
    %c0_i32 = arith.constant 0 : i32
    %c0_i32_0 = arith.constant 0 : i32
    %c0_i32_1 = arith.constant 0 : i32
    return %c0_i32, %c0_i32_0 : i32, i32
  }
  func.func @transform_5(%arg0: i32) -> (i32, i32) {
    %c0_i32 = arith.constant 0 : i32
    %c0_i32_0 = arith.constant 0 : i32
    %c0_i32_1 = arith.constant 0 : i32
    return %c0_i32, %c0_i32_0 : i32, i32
  }
  func.func @transform_6(%arg0: i32) -> (i32, i32) {
    %c0_i32 = arith.constant 0 : i32
    %c0_i32_0 = arith.constant 0 : i32
    return %arg0, %c0_i32 : i32, i32
  }
}

</mosaic_0001>

<llo_original>
// kernel: tpu_custom_call.1
$region0: #{tpu_custom_call.1}
  #allocation0 [shape = 'u32[]', space=smem, size = 0x4, offset = 0x4, fixed_abs, tag = 'smem constant byte address 0x4 - core index']
  #allocation1 [shape = 'u32[144,128]{1,0:T(1,128)}', space=vmem, size = 0x12000, scoped, tag = 'internal scratch']
  %s0 = inlined_call_operand.hbm [shape: f32[16,128], index: 0, kind: input, shape index: {}]
  %s1 = inlined_call_operand.hbm [shape: bf16[128,128], index: 1, kind: input, shape index: {}]
  %s2 = inlined_call_operand.vmem [shape: f32[1,128], index: 2, kind: input, shape index: {}]
  %s3 = inlined_call_operand.vmem [shape: f32[1,128], index: 3, kind: input, shape index: {}]
  %s4 = inlined_call_operand.vmem [shape: f32[1,128], index: 4, kind: input, shape index: {}]
  %s5 = inlined_call_operand.vmem [shape: f32[1,128], index: 5, kind: input, shape index: {}]
  %s6 = inlined_call_operand.hbm [shape: f32[16,128], index: 6, kind: output, shape index: {}]
  %s7 = sld [smem:[#allocation0]]
  $region42: #{tpu_custom_call.1} parent=0
    _
  %s9 = ssub.s32 1, %s7
  %s10 = scalar_select 0, %s9, %s7
  $region1: #{tpu_custom_call.1} parent=0
    #allocation2 [shape = 'u8[8192]{0}', space=vmem, size = 0x2000, scoped, tag = 'input window, operand 0, single buffered']
    #allocation3 [shape = 's32[1]{0}', space=sflag, size = 0x4, scoped, tag = 'scoped memory for tpu_custom_call.1']
    #allocation4 [shape = 's32[1]{0}', space=sflag, size = 0x4, scoped, tag = 'scoped memory for tpu_custom_call.1']
    #allocation5 [shape = 'u8[32768]{0}', space=vmem, size = 0x8000, scoped, tag = 'input window, operand 1, single buffered']
    #allocation6 [shape = 's32[1]{0}', space=sflag, size = 0x4, scoped, tag = 'scoped memory for tpu_custom_call.1']
    #allocation7 [shape = 'u8[8192]{0}', space=vmem, size = 0x2000, scoped, tag = 'output window, operand 0, single buffered']
    %11 = vsyncpa [#allocation3], 0
    %12 = vsyncpa [#allocation6], 0
    %13 = vsyncpa [#allocation4], 0
    // Predicated region
    $region2: #{tpu_custom_call.1} parent=1 // pred_check
      _
    $region3: #{tpu_custom_call.1} parent=1 // pred_check_branch
      %15 = sbr.rel (0) target = $region5
    $region4: #{tpu_custom_call.1} parent=1 // pred_region
      %s17 = ssub.s32 256, 256
      %18 = vsyncadd [#allocation3], %s17
      %s19 = sshll.u32 [#allocation2], 4
      %s20 = int_to_ptr.vmem [resolvable:$true] %s19
      %25 = dma.hbm_to_vmem [thread:$0]  %s0, 256, %s20, [#allocation3], 128, 128, 8
    $region5: #{tpu_custom_call.1} parent=1 // pred_fallthru
      _
    // Predicated region
    $region6: #{tpu_custom_call.1} parent=1 // pred_check
      _
    $region7: #{tpu_custom_call.1} parent=1 // pred_check_branch
      %27 = sbr.rel (0) target = $region9
    $region8: #{tpu_custom_call.1} parent=1 // pred_region
      %s29 = ssub.s32 1024, 1024
      %30 = vsyncadd [#allocation6], %s29
      %s31 = sshll.u32 [#allocation5], 4
      %s32 = int_to_ptr.vmem [resolvable:$true] %s31
      %37 = dma.hbm_to_vmem [thread:$0]  %s1, 1024, %s32, [#allocation6], 64, 64, 4
    $region9: #{tpu_custom_call.1} parent=1 // pred_fallthru
      _
    // Predicated region
    $region10: #{tpu_custom_call.1} parent=1 // pred_check
      _
    $region11: #{tpu_custom_call.1} parent=1 // pred_check_branch
      %39 = sbr.rel (0) target = $region13
    $region12: #{tpu_custom_call.1} parent=1 // pred_region
      _
    $region13: #{tpu_custom_call.1} parent=1 // pred_fallthru
      _
    // Predicated region
    $region14: #{tpu_custom_call.1} parent=1 // pred_check
      _
    $region15: #{tpu_custom_call.1} parent=1 // pred_check_branch
      %41 = sbr.rel (0) target = $region17
    $region16: #{tpu_custom_call.1} parent=1 // pred_region
      _
    $region17: #{tpu_custom_call.1} parent=1 // pred_fallthru
      _
    // Predicated region
    $region18: #{tpu_custom_call.1} parent=1 // pred_check
      _
    $region19: #{tpu_custom_call.1} parent=1 // pred_check_branch
      %43 = sbr.rel (0) target = $region21
    $region20: #{tpu_custom_call.1} parent=1 // pred_region
      _
    $region21: #{tpu_custom_call.1} parent=1 // pred_fallthru
      _
    // Predicated region
    $region22: #{tpu_custom_call.1} parent=1 // pred_check
      _
    $region23: #{tpu_custom_call.1} parent=1 // pred_check_branch
      %45 = sbr.rel (0) target = $region25
    $region24: #{tpu_custom_call.1} parent=1 // pred_region
      _
    $region25: #{tpu_custom_call.1} parent=1 // pred_fallthru
      _
    // Predicated region
    $region26: #{tpu_custom_call.1} parent=1 // pred_check
      _
    $region27: #{tpu_custom_call.1} parent=1 // pred_check_branch
      %47 = sbr.rel (0) target = $region29
    $region28: #{tpu_custom_call.1} parent=1 // pred_region
      %48 = dma.done [#allocation3], 256
    $region29: #{tpu_custom_call.1} parent=1 // pred_fallthru
      _
    // Predicated region
    $region30: #{tpu_custom_call.1} parent=1 // pred_check
      _
    $region31: #{tpu_custom_call.1} parent=1 // pred_check_branch
      %50 = sbr.rel (0) target = $region33
    $region32: #{tpu_custom_call.1} parent=1 // pred_region
      %51 = dma.done [#allocation6], 1024
    $region33: #{tpu_custom_call.1} parent=1 // pred_fallthru
      _
    %v53 = vld [vmem:[#allocation2] sm:$0xff]
    %v54 = vld [vmem:[#allocation2 + $0x8] sm:$0xff]
    %v55 = vpack.c.bf16 %v54, %v53
    %v56 = vld [vmem:[#allocation5] sm:$0xf]
    %v57 = vld [vmem:[#allocation5 + $0x4] sm:$0xf]
    %v58 = vld [vmem:[#allocation5 + $0x8] sm:$0xf]
    %v59 = vld [vmem:[#allocation5 + $0xc] sm:$0xf]
    %v60 = vld [vmem:[#allocation5 + $0x10] sm:$0xf]
    %v61 = vld [vmem:[#allocation5 + $0x14] sm:$0xf]
    %v62 = vld [vmem:[#allocation5 + $0x18] sm:$0xf]
    %v63 = vld [vmem:[#allocation5 + $0x1c] sm:$0xf]
    %v64 = vld [vmem:[#allocation5 + $0x20] sm:$0xf]
    %v65 = vld [vmem:[#allocation5 + $0x24] sm:$0xf]
    %v66 = vld [vmem:[#allocation5 + $0x28] sm:$0xf]
    %v67 = vld [vmem:[#allocation5 + $0x2c] sm:$0xf]
    %v68 = vld [vmem:[#allocation5 + $0x30] sm:$0xf]
    %v69 = vld [vmem:[#allocation5 + $0x34] sm:$0xf]
    %v70 = vld [vmem:[#allocation5 + $0x38] sm:$0xf]
    %v71 = vld [vmem:[#allocation5 + $0x3c] sm:$0xf]
    %v72 = vld [vmem:[%s2] sm:$0x1]
    %v74 = vlaneseq
    %v75 = vshrl.u32 %v74, 7
    %v76 = vsub.s32 0, %v75
    %v77 = vrot.slane %v72, %v76
    %v95 = vunpack.c.l.b16 %v56
    %v96 = vunpack.c.l.b16 %v57
    %v97 = vunpack.c.l.b16 %v58
    %v98 = vunpack.c.l.b16 %v59
    %v99 = vunpack.c.l.b16 %v60
    %v100 = vunpack.c.l.b16 %v61
    %v101 = vunpack.c.l.b16 %v62
    %v102 = vunpack.c.l.b16 %v63
    %v103 = vunpack.c.l.b16 %v64
    %v104 = vunpack.c.l.b16 %v65
    %v105 = vunpack.c.l.b16 %v66
    %v106 = vunpack.c.l.b16 %v67
    %v107 = vunpack.c.l.b16 %v68
    %v108 = vunpack.c.l.b16 %v69
    %v109 = vunpack.c.l.b16 %v70
    %v110 = vunpack.c.l.b16 %v71
    %v111 = vpack.c.b16 %v96, %v95
    %v112 = vpack.c.b16 %v98, %v97
    %v113 = vpack.c.b16 %v100, %v99
    %v114 = vpack.c.b16 %v102, %v101
    %v115 = vpack.c.b16 %v104, %v103
    %v116 = vpack.c.b16 %v106, %v105
    %v117 = vpack.c.b16 %v108, %v107
    %v118 = vpack.c.b16 %v110, %v109
    %127 = vmatprep.subr.bf16.mxu0 0
    %128 = vmatpush1.bf16.msra.mxu0 %v111
    %129 = vmatprep.subr.bf16.mxu0 0
    %130 = vmatpush1.bf16.msra.mxu0 %v112
    %131 = vmatprep.subr.bf16.mxu0 0
    %132 = vmatpush1.bf16.msra.mxu0 %v113
    %133 = vmatprep.subr.bf16.mxu0 0
    %134 = vmatpush1.bf16.msra.mxu0 %v114
    %135 = vmatprep.subr.bf16.mxu0 0
    %136 = vmatpush1.bf16.msra.mxu0 %v115
    %137 = vmatprep.subr.bf16.mxu0 0
    %138 = vmatpush1.bf16.msra.mxu0 %v116
    %139 = vmatprep.subr.bf16.mxu0 0
    %140 = vmatpush1.bf16.msra.mxu0 %v117
    %141 = vmatprep.subr.bf16.mxu0 0
    %142 = vmatpush1.bf16.msra.mxu0 %v118
    %143 = vmatprep.subr.bf16.mxu0 0
    %144 = vmatpush1.bf16.msra.mxu0 0
    %145 = vmatprep.subr.bf16.mxu0 0
    %146 = vmatpush1.bf16.msra.mxu0 0
    %147 = vmatprep.subr.bf16.mxu0 0
    %148 = vmatpush1.bf16.msra.mxu0 0
    %149 = vmatprep.subr.bf16.mxu0 0
    %150 = vmatpush1.bf16.msra.mxu0 0
    %151 = vmatprep.subr.bf16.mxu0 0
    %152 = vmatpush1.bf16.msra.mxu0 0
    %153 = vmatprep.subr.bf16.mxu0 0
    %154 = vmatpush1.bf16.msra.mxu0 0
    %155 = vmatprep.subr.bf16.mxu0 0
    %156 = vmatpush1.bf16.msra.mxu0 0
    %157 = vmatprep.subr.bf16.mxu0 0
    %158 = vmatpush1.bf16.msra.mxu0 0
    %159 = vmatprep.mubr.bf16.mxu0 0
    %160 = vmatmul.mubr.bf16.gmra.mrb[0].mxu0 %v55
    %v161 = vpop.f32.mrb[0].mxu0
    %v162 = vadd.f32 %v77, %v161
    %v163 = vpop.f32.mrb[0].mxu0
    %v164 = vpop.f32.mrb[0].mxu0
    %v165 = vadd.f32 %v77, %v164
    %v166 = vpop.f32.mrb[0].mxu0
    %167 = vdwg.mxu0
    %v168 = vmul.f32 %v162, 0.5
    %v169 = vmul.f32 %v165, 0.5
    %v170 = vmul.f32 %v162, 0.70710677
    %v171 = vmul.f32 %v165, 0.70710677
    %vm172 = vcmp.lt.f32.partialorder %v170, 0.0
    %vm173 = vcmp.lt.f32.partialorder %v171, 0.0
    %v174 = vsel %vm172, -1.0, 1.0
    %v175 = vsel %vm173, -1.0, 1.0
    %v176 = vand.u32 2147483647, %v170
    %v177 = vand.u32 2147483647, %v171
    %v178 = vmul.f32 %v176, 0.3275911
    %v179 = vmul.f32 %v177, 0.3275911
    %v180 = vadd.f32 %v178, 1.0
    %v181 = vadd.f32 %v179, 1.0
    %v182 = vrcp.pop %v180
    %v183 = vrcp.pop %v181
    %v184 = vmul.f32 %v182, 1.0614054
    %v185 = vmul.f32 %v183, 1.0614054
    %v186 = vadd.f32 %v184, -1.4531521
    %v187 = vadd.f32 %v185, -1.4531521
    %v188 = vmul.f32 %v182, %v186
    %v189 = vmul.f32 %v183, %v187
    %v190 = vadd.f32 %v188, 1.4214138
    %v191 = vadd.f32 %v189, 1.4214138
    %v192 = vmul.f32 %v182, %v190
    %v193 = vmul.f32 %v183, %v191
    %v194 = vadd.f32 %v192, -0.28449672
    %v195 = vadd.f32 %v193, -0.28449672
    %v196 = vmul.f32 %v182, %v194
    %v197 = vmul.f32 %v183, %v195
    %v198 = vadd.f32 %v196, 0.2548296
    %v199 = vadd.f32 %v197, 0.2548296
    %v200 = vmul.f32 %v182, %v198
    %v201 = vmul.f32 %v183, %v199
    %v202 = vsub.f32 0.0, %v176
    %v203 = vsub.f32 0.0, %v177
    %v204 = vmul.f32 %v202, %v176
    %v205 = vmul.f32 %v203, %v177
    %v206 = vmul.f32 %v204, 1.442695
    %v207 = vpow.pop %v206
    %v208 = vmul.f32 %v205, 1.442695
    %v209 = vpow.pop %v208
    %v210 = vmul.f32 %v200, %v207
    %v211 = vmul.f32 %v201, %v209
    %v212 = vsub.f32 1.0, %v210
    %v213 = vsub.f32 1.0, %v211
    %v214 = vmul.f32 %v174, %v212
    %v215 = vmul.f32 %v175, %v213
    %v216 = vadd.f32 %v214, 1.0
    %v217 = vadd.f32 %v215, 1.0
    %v218 = vmul.f32 %v168, %v216
    %v219 = vmul.f32 %v169, %v217
    %220 = vadd.xlane.f32.xlu0 %v218
    %v221 = vpop.xlane.xlu0 %220
    %222 = vadd.xlane.f32.xlu0 %v219
    %v223 = vpop.xlane.xlu0 %222
    %v224 = vmul.f32 %v221, 0.03125
    %v225 = vmul.f32 %v223, 0.03125
    %v226 = vsub.f32 %v218, %v224
    %v227 = vsub.f32 %v219, %v225
    %v228 = vld [vmem:[%s5] sm:$0x1]
    %v230 = vlaneseq
    %v231 = vshrl.u32 %v230, 7
    %v232 = vsub.s32 0, %v231
    %v233 = vrot.slane %v228, %v232
    %v235 = vmul.f32 %v226, %v233
    %v236 = vmul.f32 %v227, %v233
    %v237 = vmul.f32 %v235, %v235
    %v238 = vmul.f32 %v236, %v236
    %239 = vadd.xlane.f32.xlu0 %v237
    %v240 = vpop.xlane.xlu0 %239
    %241 = vadd.xlane.f32.xlu0 %v238
    %v242 = vpop.xlane.xlu0 %241
    %v243 = vmul.f32 %v240, 0.03125
    %v244 = vmul.f32 %v242, 0.03125
    %v245 = vadd.f32 %v243, 1e-12
    %v246 = vadd.f32 %v244, 1e-12
    %v247 = vrsqrt.pop %v245
    %v248 = vrsqrt.pop %v246
    %v249 = vld [vmem:[%s3] sm:$0x1]
    %v251 = vlaneseq
    %v252 = vshrl.u32 %v251, 7
    %v253 = vsub.s32 0, %v252
    %v254 = vrot.slane %v249, %v253
    %v256 = vmul.f32 %v247, %v254
    %v257 = vmul.f32 %v248, %v254
    %v258 = vmul.f32 %v235, %v256
    %v259 = vmul.f32 %v236, %v257
    %v260 = vld [vmem:[%s4] sm:$0x1]
    %v262 = vlaneseq
    %v263 = vshrl.u32 %v262, 7
    %v264 = vsub.s32 0, %v263
    %v265 = vrot.slane %v260, %v264
    %v267 = vadd.f32 %v258, %v265
    %v268 = vadd.f32 %v259, %v265
    %269 = vst [vmem:[#allocation7] sm:$0xff] %v267
    %270 = vst [vmem:[#allocation7 + $0x8] sm:$0xff] %v268
    // Predicated region
    $region34: #{tpu_custom_call.1} parent=1 // pred_check
      _
    $region35: #{tpu_custom_call.1} parent=1 // pred_check_branch
      %272 = sbr.rel (0) target = $region37
    $region36: #{tpu_custom_call.1} parent=1 // pred_region
      %s274 = ssub.s32 256, 256
      %275 = vsyncadd [#allocation4], %s274
      %s276 = sshll.u32 [#allocation7], 4
      %s277 = int_to_ptr.vmem [resolvable:$true] %s276
      %282 = dma.vmem_to_hbm [thread:$0]  %s277, 256, %s6, [#allocation4], 128, 128, 8
    $region37: #{tpu_custom_call.1} parent=1 // pred_fallthru
      _
    // Predicated region
    $region38: #{tpu_custom_call.1} parent=1 // pred_check
      _
    $region39: #{tpu_custom_call.1} parent=1 // pred_check_branch
      %284 = sbr.rel (0) target = $region41
    $region40: #{tpu_custom_call.1} parent=1 // pred_region
      %285 = dma.done [#allocation4], 256
    $region41: #{tpu_custom_call.1} parent=1 // pred_fallthru
      _
    %286 = vsyncpa [#allocation3], 1
    %287 = vsyncpa [#allocation6], 1
    %288 = vsyncpa [#allocation4], 1

</llo_original>
